<compile_context>
chip_gen: v6e
topology: v6e:2x2x1
jax: 0.10.0
libtpu: 0.0.40
codegen_flags: <defaults>
</compile_context>

<pallas_src>
import jax
import jax.numpy as jnp
from jax.experimental import pallas as pl
from jax.experimental.pallas import tpu as pltpu


def _dw_stencil(xc, top, bot, w3, bias, C):
    """3x3 depthwise stencil on one (TH, W*C) slab (lane layout w*C + c).

    xc  : (TH, WC) f32 centre rows.
    top : (1, WC) f32 row above the slab, or None if it is all zeros.
    bot : (1, WC) f32 row below the slab, or None if it is all zeros.
    w3  : (3, 3, 1, WC) f32 weights, W-tiled and pre-masked at the width edges.
    bias: (1, WC) f32.
    Returns (acc, row0, rowL): full-tile result (rows 0 / TH-1 contain wrapped
    garbage) plus the two corrected edge rows.
    """
    TH, WC = xc.shape

    # Shared lane-shifted copies: x at w-1 / w+1.  The wrapped lanes are
    # multiplied by pre-masked (zero) weights, so they never reach the output.
    xl = pltpu.roll(xc, shift=C, axis=1)        # x[., w-1, .]
    xr = pltpu.roll(xc, shift=WC - C, axis=1)   # x[., w+1, .]

    # Width partials, one per kernel row kh (all share xl/xc/xr).
    q0 = xl * w3[0, 0] + xc * w3[0, 1] + xr * w3[0, 2]
    q1 = xl * w3[1, 0] + xc * w3[1, 1] + xr * w3[1, 2]
    q2 = xl * w3[2, 0] + xc * w3[2, 1] + xr * w3[2, 2]

    # out[r] = q0[r-1] + q1[r] + q2[r+1] + bias.  The sublane rolls wrap, so
    # rows 0 and TH-1 of `acc` are wrong and are overwritten by row0 / rowL.
    acc = q1 + bias
    acc = acc + pltpu.roll(q0, shift=1, axis=0)
    acc = acc + pltpu.roll(q2, shift=TH - 1, axis=0)

    # Corrected edge rows (1-row work only).
    row0 = q1[0:1] + bias + q2[1:2]
    if top is not None:
        tl = pltpu.roll(top, shift=C, axis=1)
        tr = pltpu.roll(top, shift=WC - C, axis=1)
        row0 = row0 + (tl * w3[0, 0] + top * w3[0, 1] + tr * w3[0, 2])
    rowL = q1[TH - 1:TH] + bias + q0[TH - 2:TH - 1]
    if bot is not None:
        bl = pltpu.roll(bot, shift=C, axis=1)
        br = pltpu.roll(bot, shift=WC - C, axis=1)
        rowL = rowL + (bl * w3[2, 0] + bot * w3[2, 1] + br * w3[2, 2])
    return acc, row0, rowL


def _make_halo_kernel(C):
    """H-tiled variant: blocks (TB, TH, WC) plus single-row top/bot halos."""

    def kernel(xc_ref, xt_ref, xb_ref, w_ref, b_ref, o_ref):
        TB, TH, _ = o_ref.shape
        h = pl.program_id(1)
        nh = pl.num_programs(1)
        w3 = w_ref[...].astype(jnp.float32)      # (3, 3, 1, WC), read once
        bias = b_ref[...].astype(jnp.float32)    # (1, WC)
        for b in range(TB):                      # static, TB is tiny
            xc = xc_ref[b].astype(jnp.float32)       # (TH, WC)
            top = xt_ref[b, 0].astype(jnp.float32)   # (1, WC)
            bot = xb_ref[b, 0].astype(jnp.float32)   # (1, WC)
            # Conv zero-padding at the image boundary (halo indices are clamped
            # in the index_map; zero them here).
            top = jnp.where(h > 0, top, jnp.zeros_like(top))
            bot = jnp.where(h < nh - 1, bot, jnp.zeros_like(bot))
            acc, row0, rowL = _dw_stencil(xc, top, bot, w3, bias, C)
            o_ref[b] = acc.astype(o_ref.dtype)
            o_ref[b, 0:1, :] = row0.astype(o_ref.dtype)
            o_ref[b, TH - 1:TH, :] = rowL.astype(o_ref.dtype)

    return kernel


def _make_nohalo_kernel(C):
    """Batch-folded variant: whole images per block, halos are implicit zeros."""

    def kernel(xc_ref, w_ref, b_ref, o_ref):
        TB, TH, _ = o_ref.shape
        w3 = w_ref[...].astype(jnp.float32)
        bias = b_ref[...].astype(jnp.float32)
        for b in range(TB):                      # static, TB is tiny
            xc = xc_ref[b].astype(jnp.float32)
            acc, row0, rowL = _dw_stencil(xc, None, None, w3, bias, C)
            o_ref[b] = acc.astype(o_ref.dtype)
            o_ref[b, 0:1, :] = row0.astype(o_ref.dtype)
            o_ref[b, TH - 1:TH, :] = rowL.astype(o_ref.dtype)

    return kernel


def _pick_tiles(B, H, WC, itemsize, target_bytes=1 << 20):
    """Choose (TB, TH): batch elements and rows per block.

    Blocks target ~1 MiB (measured sweet spot for HBM-bound kernels) so that
    double buffers + stencil temporaries stay comfortably inside the scoped
    VMEM budget on every generation (incl. 64 MiB v7x)."""
    img_bytes = H * WC * itemsize
    if img_bytes > target_bytes and H % 8 == 0 and H >= 16:
        # Large image: tile H within one batch element (halo rows are DMA'd).
        best = None
        for cand in range(8, H, 8):                       # sublane aligned
            if H % cand == 0 and cand * WC * itemsize <= target_bytes:
                best = cand
        return 1, (best if best is not None else 8)
    # Small image: whole image(s) per block, no halo DMAs at all.
    max_tb = max(1, target_bytes // max(img_bytes, 1))
    tb = 1
    for d in range(1, B + 1):
        if B % d == 0 and d <= max_tb:
            tb = d
    if B // tb < 2:                  # keep >=2 grid steps when possible
        for d in range(tb, 0, -1):
            if B % d == 0 and B // d >= 2:
                tb = d
                break
    return tb, H


def dwconv_pallas(x, weight, bias, H, W, *, tiles=None):
    """x: (B, N, C) with N == H*W; weight: (3, 3, C); bias: (C,).
    Returns (B, H*W, C)."""
    B, N, C = x.shape
    assert N == H * W and H >= 2 and W >= 2
    WC = W * C
    dtype = x.dtype
    itemsize = jnp.dtype(dtype).itemsize

    # Lane-dense layout: fold (W, C) into the last dim.  Row-major compatible
    # reshapes -> no HBM copy, no padded input materialisation.
    x3 = x.reshape(B, H, WC)
    x4 = x.reshape(B, H, 1, WC)   # single-row halo view of the same bytes
    # TODO(synk): if W*C is not a multiple of 128 the output stores go masked
    # (vst.msk); pad C on the caller side for such configurations.

    # Weights tiled across W and PRE-MASKED at the width edges: the kw=0 tap
    # cannot contribute at w==0 and the kw=2 tap cannot contribute at w==W-1
    # (conv zero padding), so the kernel needs no per-tap selects.
    w_flat = jnp.tile(weight, (1, 1, W)).reshape(3, 3, 1, WC)
    lane = jnp.arange(WC)
    kw_mask = jnp.stack(
        [lane >= C, jnp.ones((WC,), dtype=bool), lane < WC - C], axis=0
    ).astype(w_flat.dtype)                                  # (3 kw, WC)
    w_flat = w_flat * kw_mask[None, :, None, :]
    b_flat = jnp.tile(bias, W).reshape(1, WC)

    if tiles is None:
        TB, TH = _pick_tiles(B, H, WC, itemsize)
    else:
        TB, TH = tiles
    assert B % TB == 0 and H % TH == 0 and TH >= 2
    assert TH % 8 == 0 or TH == H
    nb, nh = B // TB, H // TH

    cparams = pltpu.CompilerParams(
        dimension_semantics=("parallel", "parallel"),
        vmem_limit_bytes=32 * 1024 * 1024,
    )

    if nh == 1:
        # Whole image per batch element: halos are all zeros -> no halo DMAs.
        kernel = _make_nohalo_kernel(C)
        grid_spec = pltpu.PrefetchScalarGridSpec(
            num_scalar_prefetch=0,
            grid=(nb, nh),
            in_specs=[
                pl.BlockSpec((TB, TH, WC), lambda b, h: (b, h, 0)),
                pl.BlockSpec((3, 3, 1, WC), lambda b, h: (0, 0, 0, 0)),
                pl.BlockSpec((1, WC), lambda b, h: (0, 0)),
            ],
            out_specs=pl.BlockSpec((TB, TH, WC), lambda b, h: (b, h, 0)),
        )
        args = (x3, w_flat, b_flat)
    else:
        # H-tiled: single-row halo blocks above/below the tile (clamped at the
        # image boundary; zeroed in-kernel there).
        kernel = _make_halo_kernel(C)
        grid_spec = pltpu.PrefetchScalarGridSpec(
            num_scalar_prefetch=0,
            grid=(nb, nh),
            in_specs=[
                pl.BlockSpec((TB, TH, WC), lambda b, h: (b, h, 0)),
                pl.BlockSpec((TB, 1, 1, WC),
                             lambda b, h: (b, jnp.maximum(h * TH - 1, 0), 0, 0)),
                pl.BlockSpec((TB, 1, 1, WC),
                             lambda b, h: (b, jnp.minimum(h * TH + TH, H - 1), 0, 0)),
                pl.BlockSpec((3, 3, 1, WC), lambda b, h: (0, 0, 0, 0)),
                pl.BlockSpec((1, WC), lambda b, h: (0, 0)),
            ],
            out_specs=pl.BlockSpec((TB, TH, WC), lambda b, h: (b, h, 0)),
        )
        args = (x3, x4, x4, w_flat, b_flat)

    out = pl.pallas_call(
        kernel,
        out_shape=jax.ShapeDtypeStruct((B, H, WC), dtype),
        grid_spec=grid_spec,
        compiler_params=cparams,
    )(*args)

    return out.reshape(B, H * W, C)


def dwconv_reference(x, weight, bias, H, W):
    """Reference via lax.conv (NCHW, groups=C), mirroring the PyTorch module."""
    B, N, C = x.shape
    x_nchw = x.reshape(B, H, W, C).transpose(0, 3, 1, 2)
    k = weight.transpose(2, 0, 1)[:, None, :, :]           # (C, 1, 3, 3) OIHW
    y = jax.lax.conv_general_dilated(
        x_nchw, k, window_strides=(1, 1), padding=((1, 1), (1, 1)),
        feature_group_count=C,
        dimension_numbers=("NCHW", "OIHW", "NCHW"))
    y = y + bias[None, :, None, None]
    return y.reshape(B, C, H * W).transpose(0, 2, 1)


if __name__ == "__main__":
    # Small shapes consistent with the module's forward.
    B, H, W, C = 2, 16, 16, 32
    N = H * W

    key = jax.random.PRNGKey(0)
    kx, kw, kb = jax.random.split(key, 3)
    x = jax.random.normal(kx, (B, N, C), dtype=jnp.float32)
    # Synthetic depthwise parameters: (3, 3, C) weights + (C,) bias.
    weight = jax.random.normal(kw, (3, 3, C), dtype=jnp.float32) * 0.1
    bias = jax.random.normal(kb, (C,), dtype=jnp.float32) * 0.1

    ref = dwconv_reference(x, weight, bias, H, W)

    # 1) Default path (heuristic tiling; whole-image blocks, no halo DMAs).
    out = jax.block_until_ready(dwconv_pallas(x, weight, bias, H, W))
    assert out.shape == (B, N, C)
    assert jnp.allclose(out, ref, atol=1e-5, rtol=1e-5), (
        float(jnp.max(jnp.abs(out - ref))))

    # 2) Batch-folded path (two images per block).
    out_b = jax.block_until_ready(
        dwconv_pallas(x, weight, bias, H, W, tiles=(2, H)))
    assert jnp.allclose(out_b, ref, atol=1e-5, rtol=1e-5), (
        float(jnp.max(jnp.abs(out_b - ref))))

    # 3) H-tiled path with halo rows (used automatically for large images).
    out_h = jax.block_until_ready(
        dwconv_pallas(x, weight, bias, H, W, tiles=(1, 8)))
    assert jnp.allclose(out_h, ref, atol=1e-5, rtol=1e-5), (
        float(jnp.max(jnp.abs(out_h - ref))))

    print("KERNEL_OK")
</pallas_src>

<mosaic_0001>
module attributes {stable_mosaic.version = 11 : i64} {
  func.func @kernel(%arg0: i32, %arg1: i32, %arg2: memref<1x16x512xf32, #tpu.memory_space<vmem>>, %arg3: memref<3x3x1x512xf32, #tpu.memory_space<vmem>>, %arg4: memref<1x512xf32, #tpu.memory_space<vmem>>, %arg5: memref<1x16x512xf32, #tpu.memory_space<vmem>>) attributes {dimension_semantics = [#tpu.dimension_semantics<parallel>, #tpu.dimension_semantics<parallel>], iteration_bounds = array<i64: 2, 1>, scalar_prefetch = 0 : i64, scratch_operands = 0 : i64, tpu.core_type = #tpu.core_type<tc>, window_params = [{transform_indices = @transform_0, window_bounds = array<i64: 1, 16, 512>}, {pipeline_mode = #tpu.pipeline_mode<synchronous>, transform_indices = @transform_1, window_bounds = array<i64: 3, 3, 1, 512>}, {pipeline_mode = #tpu.pipeline_mode<synchronous>, transform_indices = @transform_2, window_bounds = array<i64: 1, 512>}, {transform_indices = @transform_3, window_bounds = array<i64: 1, 16, 512>}]} {
    %c0 = arith.constant 0 : index
    %c0_0 = arith.constant 0 : index
    %c0_1 = arith.constant 0 : index
    %c0_2 = arith.constant 0 : index
    %0 = vector.load %arg3[%c0, %c0_0, %c0_1, %c0_2] : memref<3x3x1x512xf32, #tpu.memory_space<vmem>>, vector<3x3x1x512xf32>
    %c0_3 = arith.constant 0 : index
    %c0_4 = arith.constant 0 : index
    %1 = vector.load %arg4[%c0_3, %c0_4] : memref<1x512xf32, #tpu.memory_space<vmem>>, vector<1x512xf32>
    %c0_5 = arith.constant 0 : index
    %c0_6 = arith.constant 0 : index
    %c0_7 = arith.constant 0 : index
    %2 = vector.load %arg2[%c0_5, %c0_6, %c0_7] : memref<1x16x512xf32, #tpu.memory_space<vmem>>, vector<1x16x512xf32>
    %3 = vector.shape_cast %2 : vector<1x16x512xf32> to vector<16x512xf32>
    %c32_i32 = arith.constant 32 : i32
    %4 = tpu.dynamic_rotate %3 by %c32_i32 dim 1 : vector<16x512xf32>, i32 -> vector<16x512xf32>
    %c480_i32 = arith.constant 480 : i32
    %5 = tpu.dynamic_rotate %3 by %c480_i32 dim 1 : vector<16x512xf32>, i32 -> vector<16x512xf32>
    %6 = vector.extract_strided_slice %0 {offsets = [0, 0, 0, 0], sizes = [1, 1, 1, 512], strides = [1, 1, 1, 1]} : vector<3x3x1x512xf32> to vector<1x1x1x512xf32>
    %7 = vector.shape_cast %6 : vector<1x1x1x512xf32> to vector<1x512xf32>
    %8 = vector.broadcast %7 : vector<1x512xf32> to vector<16x512xf32>
    %9 = arith.mulf %4, %8 : vector<16x512xf32>
    %10 = vector.extract_strided_slice %0 {offsets = [0, 1, 0, 0], sizes = [1, 1, 1, 512], strides = [1, 1, 1, 1]} : vector<3x3x1x512xf32> to vector<1x1x1x512xf32>
    %11 = vector.shape_cast %10 : vector<1x1x1x512xf32> to vector<1x512xf32>
    %12 = vector.broadcast %11 : vector<1x512xf32> to vector<16x512xf32>
    %13 = arith.mulf %3, %12 : vector<16x512xf32>
    %14 = arith.addf %9, %13 : vector<16x512xf32>
    %15 = vector.extract_strided_slice %0 {offsets = [0, 2, 0, 0], sizes = [1, 1, 1, 512], strides = [1, 1, 1, 1]} : vector<3x3x1x512xf32> to vector<1x1x1x512xf32>
    %16 = vector.shape_cast %15 : vector<1x1x1x512xf32> to vector<1x512xf32>
    %17 = vector.broadcast %16 : vector<1x512xf32> to vector<16x512xf32>
    %18 = arith.mulf %5, %17 : vector<16x512xf32>
    %19 = arith.addf %14, %18 : vector<16x512xf32>
    %20 = vector.extract_strided_slice %0 {offsets = [1, 0, 0, 0], sizes = [1, 1, 1, 512], strides = [1, 1, 1, 1]} : vector<3x3x1x512xf32> to vector<1x1x1x512xf32>
    %21 = vector.shape_cast %20 : vector<1x1x1x512xf32> to vector<1x512xf32>
    %22 = vector.broadcast %21 : vector<1x512xf32> to vector<16x512xf32>
    %23 = arith.mulf %4, %22 : vector<16x512xf32>
    %24 = vector.extract_strided_slice %0 {offsets = [1, 1, 0, 0], sizes = [1, 1, 1, 512], strides = [1, 1, 1, 1]} : vector<3x3x1x512xf32> to vector<1x1x1x512xf32>
    %25 = vector.shape_cast %24 : vector<1x1x1x512xf32> to vector<1x512xf32>
    %26 = vector.broadcast %25 : vector<1x512xf32> to vector<16x512xf32>
    %27 = arith.mulf %3, %26 : vector<16x512xf32>
    %28 = arith.addf %23, %27 : vector<16x512xf32>
    %29 = vector.extract_strided_slice %0 {offsets = [1, 2, 0, 0], sizes = [1, 1, 1, 512], strides = [1, 1, 1, 1]} : vector<3x3x1x512xf32> to vector<1x1x1x512xf32>
    %30 = vector.shape_cast %29 : vector<1x1x1x512xf32> to vector<1x512xf32>
    %31 = vector.broadcast %30 : vector<1x512xf32> to vector<16x512xf32>
    %32 = arith.mulf %5, %31 : vector<16x512xf32>
    %33 = arith.addf %28, %32 : vector<16x512xf32>
    %34 = vector.extract_strided_slice %0 {offsets = [2, 0, 0, 0], sizes = [1, 1, 1, 512], strides = [1, 1, 1, 1]} : vector<3x3x1x512xf32> to vector<1x1x1x512xf32>
    %35 = vector.shape_cast %34 : vector<1x1x1x512xf32> to vector<1x512xf32>
    %36 = vector.broadcast %35 : vector<1x512xf32> to vector<16x512xf32>
    %37 = arith.mulf %4, %36 : vector<16x512xf32>
    %38 = vector.extract_strided_slice %0 {offsets = [2, 1, 0, 0], sizes = [1, 1, 1, 512], strides = [1, 1, 1, 1]} : vector<3x3x1x512xf32> to vector<1x1x1x512xf32>
    %39 = vector.shape_cast %38 : vector<1x1x1x512xf32> to vector<1x512xf32>
    %40 = vector.broadcast %39 : vector<1x512xf32> to vector<16x512xf32>
    %41 = arith.mulf %3, %40 : vector<16x512xf32>
    %42 = arith.addf %37, %41 : vector<16x512xf32>
    %43 = vector.extract_strided_slice %0 {offsets = [2, 2, 0, 0], sizes = [1, 1, 1, 512], strides = [1, 1, 1, 1]} : vector<3x3x1x512xf32> to vector<1x1x1x512xf32>
    %44 = vector.shape_cast %43 : vector<1x1x1x512xf32> to vector<1x512xf32>
    %45 = vector.broadcast %44 : vector<1x512xf32> to vector<16x512xf32>
    %46 = arith.mulf %5, %45 : vector<16x512xf32>
    %47 = arith.addf %42, %46 : vector<16x512xf32>
    %48 = vector.broadcast %1 : vector<1x512xf32> to vector<16x512xf32>
    %49 = arith.addf %33, %48 : vector<16x512xf32>
    %c1_i32 = arith.constant 1 : i32
    %50 = tpu.dynamic_rotate %19 by %c1_i32 dim 0 : vector<16x512xf32>, i32 -> vector<16x512xf32>
    %51 = arith.addf %49, %50 : vector<16x512xf32>
    %c15_i32 = arith.constant 15 : i32
    %52 = tpu.dynamic_rotate %47 by %c15_i32 dim 0 : vector<16x512xf32>, i32 -> vector<16x512xf32>
    %53 = arith.addf %51, %52 : vector<16x512xf32>
    %54 = vector.extract_strided_slice %33 {offsets = [0, 0], sizes = [1, 512], strides = [1, 1]} : vector<16x512xf32> to vector<1x512xf32>
    %55 = arith.addf %54, %1 : vector<1x512xf32>
    %56 = vector.extract_strided_slice %47 {offsets = [1, 0], sizes = [1, 512], strides = [1, 1]} : vector<16x512xf32> to vector<1x512xf32>
    %57 = arith.addf %55, %56 : vector<1x512xf32>
    %58 = vector.extract_strided_slice %33 {offsets = [15, 0], sizes = [1, 512], strides = [1, 1]} : vector<16x512xf32> to vector<1x512xf32>
    %59 = arith.addf %58, %1 : vector<1x512xf32>
    %60 = vector.extract_strided_slice %19 {offsets = [14, 0], sizes = [1, 512], strides = [1, 1]} : vector<16x512xf32> to vector<1x512xf32>
    %61 = arith.addf %59, %60 : vector<1x512xf32>
    %c0_8 = arith.constant 0 : index
    %c0_9 = arith.constant 0 : index
    %c0_10 = arith.constant 0 : index
    %62 = vector.load %arg5[%c0_8, %c0_9, %c0_10] : memref<1x16x512xf32, #tpu.memory_space<vmem>>, vector<1x16x512xf32>
    %63 = vector.shape_cast %62 : vector<1x16x512xf32> to vector<16x512xf32>
    %64 = vector.shape_cast %53 : vector<16x512xf32> to vector<1x16x512xf32>
    tpu.vector_store %arg5[%c0_8, %c0_9, %c0_10], %64 {strides = array<i32>} : memref<1x16x512xf32, #tpu.memory_space<vmem>>, vector<1x16x512xf32>,
    %c0_11 = arith.constant 0 : index
    %c0_12 = arith.constant 0 : index
    %c0_13 = arith.constant 0 : index
    %65 = vector.load %arg5[%c0_11, %c0_12, %c0_13] : memref<1x16x512xf32, #tpu.memory_space<vmem>>, vector<1x1x512xf32>
    %66 = vector.shape_cast %65 : vector<1x1x512xf32> to vector<1x512xf32>
    %67 = vector.shape_cast %57 : vector<1x512xf32> to vector<1x1x512xf32>
    tpu.vector_store %arg5[%c0_11, %c0_12, %c0_13], %67 {strides = array<i32>} : memref<1x16x512xf32, #tpu.memory_space<vmem>>, vector<1x1x512xf32>,
    %c0_14 = arith.constant 0 : index
    %c15 = arith.constant 15 : index
    %c0_15 = arith.constant 0 : index
    %68 = vector.load %arg5[%c0_14, %c15, %c0_15] : memref<1x16x512xf32, #tpu.memory_space<vmem>>, vector<1x1x512xf32>
    %69 = vector.shape_cast %68 : vector<1x1x512xf32> to vector<1x512xf32>
    %70 = vector.shape_cast %61 : vector<1x512xf32> to vector<1x1x512xf32>
    tpu.vector_store %arg5[%c0_14, %c15, %c0_15], %70 {strides = array<i32>} : memref<1x16x512xf32, #tpu.memory_space<vmem>>, vector<1x1x512xf32>,
    return
  }
  func.func @transform_0(%arg0: i32, %arg1: i32) -> (i32, i32, i32) {
    %c0_i32 = arith.constant 0 : i32
    %c0_i32_0 = arith.constant 0 : i32
    return %arg0, %arg1, %c0_i32 : i32, i32, i32
  }
  func.func @transform_1(%arg0: i32, %arg1: i32) -> (i32, i32, i32, i32) {
    %c0_i32 = arith.constant 0 : i32
    %c0_i32_0 = arith.constant 0 : i32
    %c0_i32_1 = arith.constant 0 : i32
    %c0_i32_2 = arith.constant 0 : i32
    %c0_i32_3 = arith.constant 0 : i32
    return %c0_i32, %c0_i32_0, %c0_i32_1, %c0_i32_2 : i32, i32, i32, i32
  }
  func.func @transform_2(%arg0: i32, %arg1: i32) -> (i32, i32) {
    %c0_i32 = arith.constant 0 : i32
    %c0_i32_0 = arith.constant 0 : i32
    %c0_i32_1 = arith.constant 0 : i32
    return %c0_i32, %c0_i32_0 : i32, i32
  }
  func.func @transform_3(%arg0: i32, %arg1: i32) -> (i32, i32, i32) {
    %c0_i32 = arith.constant 0 : i32
    %c0_i32_0 = arith.constant 0 : i32
    return %arg0, %arg1, %c0_i32 : i32, i32, i32
  }
}

</mosaic_0001>

<llo_original>
// kernel: tpu_custom_call.1
$region0: #{tpu_custom_call.1}
  #allocation0 [shape = 'u32[]', space=smem, size = 0x4, offset = 0x4, fixed_abs, tag = 'smem constant byte address 0x4 - core index']
  #allocation1 [shape = 'u32[144,128]{1,0:T(1,128)}', space=vmem, size = 0x12000, scoped, tag = 'internal scratch']
  %s0 = inlined_call_operand.hbm [shape: f32[2,16,512], index: 0, kind: input, shape index: {}]
  %s1 = inlined_call_operand.hbm [shape: f32[3,3,1,512], index: 1, kind: input, shape index: {}]
  %s2 = inlined_call_operand.hbm [shape: f32[1,512], index: 2, kind: input, shape index: {}]
  %s3 = inlined_call_operand.hbm [shape: f32[2,16,512], index: 3, kind: output, shape index: {}]
  %s4 = sld [smem:[#allocation0]]
  $region57: #{tpu_custom_call.1} parent=0
    _
  %s6 = ssub.s32 1, %s4
  %s7 = scalar_select 0, %s6, %s4
  $region1: #{tpu_custom_call.1} parent=0
    #allocation2 [shape = 'u8[65536]{0}', space=vmem, size = 0x10000, scoped, tag = 'input window, operand 0']
    #allocation3 [shape = 's32[2]{0}', space=sflag, size = 0x8, scoped, tag = 'scoped memory for tpu_custom_call.1']
    #allocation4 [shape = 's32[2]{0}', space=sflag, size = 0x8, scoped, tag = 'scoped memory for tpu_custom_call.1']
    #allocation5 [shape = 'u8[18432]{0}', space=vmem, size = 0x4800, scoped, tag = 'input window, operand 1, single buffered']
    #allocation6 [shape = 's32[1]{0}', space=sflag, size = 0x4, scoped, tag = 'scoped memory for tpu_custom_call.1']
    #allocation7 [shape = 'u8[2048]{0}', space=vmem, size = 0x800, scoped, tag = 'input window, operand 2, single buffered']
    #allocation8 [shape = 'u8[65536]{0}', space=vmem, size = 0x10000, scoped, tag = 'output window, operand 0']
    %8 = vsyncpa [#allocation3], 0
    %s9 = scalar_lea.sflag [#allocation3], 1
    %10 = vsyncpa %s9, 0
    %11 = vsyncpa [#allocation6], 0
    %12 = vsyncpa [#allocation4], 0
    %s13 = scalar_lea.sflag [#allocation4], 1
    %14 = vsyncpa %s13, 0
    loop: start=0, step=1, limit=4
    $region2: #{tpu_custom_call.1} parent=1 // loop_pre_header
      _
    $region3: #{tpu_custom_call.1} parent=1 // loop_header
      %s16 = sphi 0, %s20
      %p17 = scmp.ge.s32.totalorder %s16, 4
      %s23 = sphi 0, %s35
      %s24 = sphi 0, %s31
      %s25 = sphi 0, %s23
      %s26 = sphi 0, %s24
      %s27 = sphi 0, %s25
      %s28 = sphi 0, %s26
      %s40 = sphi 0, %s42
      %s43 = sphi 0, %s40
      %s44 = sphi 0, %s43
      %s60 = sphi 0, %s44
      %s64 = sphi 0, %s64
      %s66 = sphi 0, %s64
      %s67 = sphi 0, %s66
      %s81 = sphi 0, %s67
      %s85 = sphi 0, %s85
      %s87 = sphi 0, %s85
      %s88 = sphi 0, %s87
      %s102 = sphi 0, %s88
      %s110 = sphi 0, %s112
      %s113 = sphi 0, %s110
      %s114 = sphi 0, %s113
      %s130 = sphi 0, %s114
    $region4: #{tpu_custom_call.1} parent=1 // loop_header_branch
      %19 = sbr.rel (%p17) target = $region8
    $region5: #{tpu_custom_call.1} parent=1 // loop_body
      %s21 = ssub.s32 %s16, 1
      %s22 = ssub.s32 %s16, 2
      %s29 = sadd.s32 1, %s24
      %p30 = scmp.ge.s32.totalorder %s29, 1
      %s31 = scalar_select %p30, 0, %s29
      %s32 = sadd.s32 1, %s23
      %s33 = scalar_select %p30, %s32, %s23
      %p34 = scmp.ge.s32.totalorder %s33, 2
      %s35 = scalar_select %p34, 0, %s33
      %s36 = ssub.s32 %s23, %s35
      %s37 = ssub.s32 %s24, %s31
      %s38 = sor.u32 %s36, %s37
      %p39 = scmp.eq.s32.totalorder %s38, 0
      %s41 = sadd.s32 %s40, 1
      %s42 = scalar_select %p39, %s40, %s41
      %p45 = pneg %p39
      %p46 = scmp.eq.s32.totalorder %s16, 1
      %p47 = por %p45, %p46
      %p48 = scmp.ne.s32.totalorder %s40, %s43
      %p49 = scmp.eq.s32.totalorder %s16, 0
      %p50 = por %p48, %p49
      %p51 = scmp.ne.s32.totalorder %s40, %s43
      %p52 = scmp.eq.s32.totalorder %s21, 1
      %p53 = por %p51, %p52
      %p54 = scmp.ne.s32.totalorder %s43, %s44
      %p55 = scmp.eq.s32.totalorder %s21, 0
      %p56 = por %p54, %p55
      %p57 = scmp.ne.s32.totalorder %s43, %s44
      %p58 = scmp.eq.s32.totalorder %s22, 1
      %p59 = por %p57, %p58
      %p61 = scmp.ne.s32.totalorder %s44, %s60
      %p62 = scmp.eq.s32.totalorder %s22, 0
      %p63 = por %p61, %p62
      %s65 = sadd.s32 %s64, 1
      %p68 = scmp.eq.s32.totalorder %s16, 1
      %p69 = scmp.ne.s32.totalorder %s64, %s66
      %p70 = scmp.eq.s32.totalorder %s16, 0
      %p71 = por %p69, %p70
      %p72 = scmp.ne.s32.totalorder %s64, %s66
      %p73 = scmp.eq.s32.totalorder %s21, 1
      %p74 = por %p72, %p73
      %p75 = scmp.ne.s32.totalorder %s66, %s67
      %p76 = scmp.eq.s32.totalorder %s21, 0
      %p77 = por %p75, %p76
      %p78 = scmp.ne.s32.totalorder %s66, %s67
      %p79 = scmp.eq.s32.totalorder %s22, 1
      %p80 = por %p78, %p79
      %p82 = scmp.ne.s32.totalorder %s67, %s81
      %p83 = scmp.eq.s32.totalorder %s22, 0
      %p84 = por %p82, %p83
      %s86 = sadd.s32 %s85, 1
      %p89 = scmp.eq.s32.totalorder %s16, 1
      %p90 = scmp.ne.s32.totalorder %s85, %s87
      %p91 = scmp.eq.s32.totalorder %s16, 0
      %p92 = por %p90, %p91
      %p93 = scmp.ne.s32.totalorder %s85, %s87
      %p94 = scmp.eq.s32.totalorder %s21, 1
      %p95 = por %p93, %p94
      %p96 = scmp.ne.s32.totalorder %s87, %s88
      %p97 = scmp.eq.s32.totalorder %s21, 0
      %p98 = por %p96, %p97
      %p99 = scmp.ne.s32.totalorder %s87, %s88
      %p100 = scmp.eq.s32.totalorder %s22, 1
      %p101 = por %p99, %p100
      %p103 = scmp.ne.s32.totalorder %s88, %s102
      %p104 = scmp.eq.s32.totalorder %s22, 0
      %p105 = por %p103, %p104
      %s106 = ssub.s32 %s23, %s35
      %s107 = ssub.s32 %s24, %s31
      %s108 = sor.u32 %s106, %s107
      %p109 = scmp.eq.s32.totalorder %s108, 0
      %s111 = sadd.s32 %s110, 1
      %s112 = scalar_select %p109, %s110, %s111
      %p115 = pneg %p109
      %p116 = scmp.eq.s32.totalorder %s16, 1
      %p117 = por %p115, %p116
      %p118 = scmp.ne.s32.totalorder %s110, %s113
      %p119 = scmp.eq.s32.totalorder %s16, 0
      %p120 = por %p118, %p119
      %p121 = scmp.ne.s32.totalorder %s110, %s113
      %p122 = scmp.eq.s32.totalorder %s21, 1
      %p123 = por %p121, %p122
      %p124 = scmp.ne.s32.totalorder %s113, %s114
      %p125 = scmp.eq.s32.totalorder %s21, 0
      %p126 = por %p124, %p125
      %p127 = scmp.ne.s32.totalorder %s113, %s114
      %p128 = scmp.eq.s32.totalorder %s22, 1
      %p129 = por %p127, %p128
      %p131 = scmp.ne.s32.totalorder %s114, %s130
      %p132 = scmp.eq.s32.totalorder %s22, 0
      %p133 = por %p131, %p132
      %p134 = scmp.le.s32.totalorder 1, %s16
      %p135 = scmp.lt.s32.totalorder %s16, 3
      %p136 = pnand %p134, %p135
      %p137 = pneg %p136
      // Predicated region
      $region9: #{tpu_custom_call.1} parent=5 // pred_check
        _
      $region10: #{tpu_custom_call.1} parent=5 // pred_check_branch
        %139 = sbr.rel (%p136) target = $region12
      $region11: #{tpu_custom_call.1} parent=5 // pred_region
        %s140 = ssub.s32 %s16, 1
        // Predicated region
        $region13: #{tpu_custom_call.1} parent=11 // pred_check
          %p141 = pneg %p77
        $region14: #{tpu_custom_call.1} parent=11 // pred_check_branch
          %143 = sbr.rel (%p141) target = $region16
        $region15: #{tpu_custom_call.1} parent=11 // pred_region
          %s145 = ssub.s32 576, 576
          %146 = vsyncadd [#allocation6], %s145
          %s147 = sshll.u32 [#allocation5], 4
          %s148 = int_to_ptr.vmem [resolvable:$true] %s147
          %153 = dma.hbm_to_vmem [thread:$0]  %s1, 576, %s148, [#allocation6], 64, 64, 4
        $region16: #{tpu_custom_call.1} parent=11 // pred_fallthru
          _
        // Predicated region
        $region17: #{tpu_custom_call.1} parent=11 // pred_check
          %p154 = pneg %p98
        $region18: #{tpu_custom_call.1} parent=11 // pred_check_branch
          %156 = sbr.rel (%p154) target = $region20
        $region19: #{tpu_custom_call.1} parent=11 // pred_region
          %s158 = ssub.s32 64, 64
          %159 = vsyncadd [#allocation6], %s158
          %s161 = sshll.u32 [#allocation7], 4
          %s162 = int_to_ptr.vmem [resolvable:$true] %s161
          %164 = dma.hbm_to_vmem [thread:$0]  %s2, 64, %s162, [#allocation6]
        $region20: #{tpu_custom_call.1} parent=11 // pred_fallthru
          _
      $region12: #{tpu_custom_call.1} parent=5 // pred_fallthru
        _
      %p165 = scmp.lt.s32.totalorder %s16, 2
      // Predicated region
      $region21: #{tpu_custom_call.1} parent=5 // pred_check
        %p166 = pneg %p165
      $region22: #{tpu_custom_call.1} parent=5 // pred_check_branch
        %168 = sbr.rel (%p166) target = $region24
      $region23: #{tpu_custom_call.1} parent=5 // pred_region
        // Predicated region
        $region25: #{tpu_custom_call.1} parent=23 // pred_check
          %p169 = pneg %p50
        $region26: #{tpu_custom_call.1} parent=23 // pred_check_branch
          %171 = sbr.rel (%p169) target = $region28
        $region27: #{tpu_custom_call.1} parent=23 // pred_region
          %s172 = sand.u32 %s40, 1
          %s173 = scalar_lea.sflag [#allocation3], %s172
          %s174 = sand.u32 %s40, 1
          %s175 = smul.addr %s174, 64
          %s176 = scalar_lea.vmem [#allocation2], %s175
          %s177 = smul.u32 2, %s24
          %s179 = ssub.s32 1024, 1024
          %180 = vsyncadd %s173, %s179
          %s181 = smul.addr %s177, 4
          %s182 = smul.addr %s23, 8
          %s183 = sadd.s32 %s181, %s182
          %s184 = smul.addr %s183, 128
          %s185 = scalar_lea.hbm %s0, %s184
          %s186 = sshll.u32 %s176, 4
          %s187 = int_to_ptr.vmem [resolvable:$true] %s186
          %192 = dma.hbm_to_vmem [thread:$0]  %s185, 1024, %s187, %s173, 512, 512, 32
        $region28: #{tpu_custom_call.1} parent=23 // pred_fallthru
          _
      $region24: #{tpu_custom_call.1} parent=5 // pred_fallthru
        _
      %p193 = scmp.le.s32.totalorder 1, %s16
      %p194 = scmp.lt.s32.totalorder %s16, 3
      %p195 = pnand %p193, %p194
      %p196 = pneg %p195
      // Predicated region
      $region29: #{tpu_custom_call.1} parent=5 // pred_check
        _
      $region30: #{tpu_custom_call.1} parent=5 // pred_check_branch
        %198 = sbr.rel (%p195) target = $region32
      $region31: #{tpu_custom_call.1} parent=5 // pred_region
        %s199 = ssub.s32 %s16, 1
        %s200 = sand.u32 %s43, 1
        %s201 = scalar_lea.sflag [#allocation3], %s200
        %s202 = sand.u32 %s43, 1
        %s203 = smul.addr %s202, 64
        %s204 = scalar_lea.vmem [#allocation2], %s203
        // Predicated region
        $region33: #{tpu_custom_call.1} parent=31 // pred_check
          %p205 = pneg %p56
        $region34: #{tpu_custom_call.1} parent=31 // pred_check_branch
          %207 = sbr.rel (%p205) target = $region36
        $region35: #{tpu_custom_call.1} parent=31 // pred_region
          %208 = dma.done %s201, 1024
        $region36: #{tpu_custom_call.1} parent=31 // pred_fallthru
          _
        // Predicated region
        $region37: #{tpu_custom_call.1} parent=31 // pred_check
          %p209 = pneg %p77
        $region38: #{tpu_custom_call.1} parent=31 // pred_check_branch
          %211 = sbr.rel (%p209) target = $region40
        $region39: #{tpu_custom_call.1} parent=31 // pred_region
          %212 = dma.done [#allocation6], 576
        $region40: #{tpu_custom_call.1} parent=31 // pred_fallthru
          _
        // Predicated region
        $region41: #{tpu_custom_call.1} parent=31 // pred_check
          %p213 = pneg %p98
        $region42: #{tpu_custom_call.1} parent=31 // pred_check_branch
          %215 = sbr.rel (%p213) target = $region44
        $region43: #{tpu_custom_call.1} parent=31 // pred_region
          %216 = dma.done [#allocation6], 64
        $region44: #{tpu_custom_call.1} parent=31 // pred_fallthru
          _
        %s217 = sand.u32 %s43, 1
        %s218 = scalar_lea.sflag [#allocation3], %s217
        %s219 = sand.u32 %s43, 1
        %s220 = smul.addr %s219, 64
        %s221 = scalar_lea.vmem [#allocation2], %s220
        %p222 = pneg %p56
        %p223 = pneg %p53
        %p224 = pneg %p77
        %p225 = pneg %p74
        %p226 = pneg %p98
        %p227 = pneg %p95
        %p228 = pneg %p126
        %p229 = pneg %p123
        %s230 = sand.u32 %s113, 1
        %s231 = scalar_lea.sflag [#allocation4], %s230
        %s232 = sand.u32 %s113, 1
        %s233 = smul.addr %s232, 64
        %s234 = scalar_lea.vmem [#allocation8], %s233
        %s235 = smul.u32 2, %s26
        %s236 = smul.u32 2, %s26
        %v237 = vld [vmem:[#allocation5] sm:$0xf]
        %v238 = vld [vmem:[#allocation5 + $0x4] sm:$0xf]
        %v239 = vld [vmem:[#allocation5 + $0x8] sm:$0xf]
        %v240 = vld [vmem:[#allocation5 + $0xc] sm:$0xf]
        %v241 = vld [vmem:[#allocation5 + $0x10] sm:$0xf]
        %v242 = vld [vmem:[#allocation5 + $0x14] sm:$0xf]
        %v243 = vld [vmem:[#allocation5 + $0x18] sm:$0xf]
        %v244 = vld [vmem:[#allocation5 + $0x1c] sm:$0xf]
        %v245 = vld [vmem:[#allocation5 + $0x20] sm:$0xf]
        %v246 = vld [vmem:[#allocation7] sm:$0xf]
        %v247 = vld [vmem:[%s204] sm:$0xff]
        %v248 = vld [vmem:[%s204 + $0x8] sm:$0xff]
        %v249 = vld [vmem:[%s204 + $0x10] sm:$0xff]
        %v250 = vld [vmem:[%s204 + $0x18] sm:$0xff]
        %v251 = vld [vmem:[%s204 + $0x20] sm:$0xff]
        %v252 = vld [vmem:[%s204 + $0x28] sm:$0xff]
        %v253 = vld [vmem:[%s204 + $0x30] sm:$0xff]
        %v254 = vld [vmem:[%s204 + $0x38] sm:$0xff]
        %255 = vrot.lane.b32.xlu0 %v247, 32
        %v256 = vpop.permute.xlu0 %255
        %257 = vrot.lane.b32.xlu0 %v251, 32
        %v258 = vpop.permute.xlu0 %257
        %259 = vrot.lane.b32.xlu0 %v248, 32
        %v260 = vpop.permute.xlu0 %259
        %261 = vrot.lane.b32.xlu0 %v252, 32
        %v262 = vpop.permute.xlu0 %261
        %263 = vrot.lane.b32.xlu0 %v249, 32
        %v264 = vpop.permute.xlu0 %263
        %265 = vrot.lane.b32.xlu0 %v253, 32
        %v266 = vpop.permute.xlu0 %265
        %267 = vrot.lane.b32.xlu0 %v250, 32
        %v268 = vpop.permute.xlu0 %267
        %269 = vrot.lane.b32.xlu0 %v254, 32
        %v270 = vpop.permute.xlu0 %269
        %v271 = vlaneseq
        %v272 = vand.u32 %v271, 127
        %vm273 = vcmp.lt.s32.totalorder %v272, 32
        %v274 = vsel %vm273, %v264, %v268
        %v275 = vsel %vm273, %v266, %v270
        %v276 = vsel %vm273, %v260, %v264
        %v277 = vsel %vm273, %v262, %v266
        %v278 = vsel %vm273, %v256, %v260
        %v279 = vsel %vm273, %v258, %v262
        %v280 = vsel %vm273, %v268, %v256
        %v281 = vsel %vm273, %v270, %v258
        %282 = vrot.lane.b32.xlu0 %v247, 96
        %v283 = vpop.permute.xlu0 %282
        %284 = vrot.lane.b32.xlu0 %v251, 96
        %v285 = vpop.permute.xlu0 %284
        %286 = vrot.lane.b32.xlu0 %v248, 96
        %v287 = vpop.permute.xlu0 %286
        %288 = vrot.lane.b32.xlu0 %v252, 96
        %v289 = vpop.permute.xlu0 %288
        %290 = vrot.lane.b32.xlu0 %v249, 96
        %v291 = vpop.permute.xlu0 %290
        %292 = vrot.lane.b32.xlu0 %v253, 96
        %v293 = vpop.permute.xlu0 %292
        %294 = vrot.lane.b32.xlu0 %v250, 96
        %v295 = vpop.permute.xlu0 %294
        %296 = vrot.lane.b32.xlu0 %v254, 96
        %v297 = vpop.permute.xlu0 %296
        %vm298 = vcmp.lt.s32.totalorder %v272, 96
        %v299 = vsel %vm298, %v291, %v295
        %v300 = vsel %vm298, %v293, %v297
        %v301 = vsel %vm298, %v287, %v291
        %v302 = vsel %vm298, %v289, %v293
        %v303 = vsel %vm298, %v283, %v287
        %v304 = vsel %vm298, %v285, %v289
        %v305 = vsel %vm298, %v295, %v283
        %v306 = vsel %vm298, %v297, %v285
        %v308 = vlaneseq
        %v309 = vshrl.u32 %v308, 7
        %v310 = vsub.s32 0, %v309
        %v311 = vrot.slane %v237, %v310
        %v312 = vlaneseq
        %v313 = vshrl.u32 %v312, 7
        %v314 = vsub.s32 1, %v313
        %v315 = vrot.slane %v237, %v314
        %v316 = vlaneseq
        %v317 = vshrl.u32 %v316, 7
        %v318 = vsub.s32 2, %v317
        %v319 = vrot.slane %v237, %v318
        %v320 = vlaneseq
        %v321 = vshrl.u32 %v320, 7
        %v322 = vsub.s32 3, %v321
        %v323 = vrot.slane %v237, %v322
        %v328 = vmul.f32 %v280, %v311
        %v329 = vmul.f32 %v278, %v315
        %v330 = vmul.f32 %v276, %v319
        %v331 = vmul.f32 %v274, %v323
        %v332 = vmul.f32 %v281, %v311
        %v333 = vmul.f32 %v279, %v315
        %v334 = vmul.f32 %v277, %v319
        %v335 = vmul.f32 %v275, %v323
        %v337 = vlaneseq
        %v338 = vshrl.u32 %v337, 7
        %v339 = vsub.s32 0, %v338
        %v340 = vrot.slane %v238, %v339
        %v341 = vlaneseq
        %v342 = vshrl.u32 %v341, 7
        %v343 = vsub.s32 1, %v342
        %v344 = vrot.slane %v238, %v343
        %v345 = vlaneseq
        %v346 = vshrl.u32 %v345, 7
        %v347 = vsub.s32 2, %v346
        %v348 = vrot.slane %v238, %v347
        %v349 = vlaneseq
        %v350 = vshrl.u32 %v349, 7
        %v351 = vsub.s32 3, %v350
        %v352 = vrot.slane %v238, %v351
        %v357 = vmul.f32 %v247, %v340
        %v358 = vmul.f32 %v248, %v344
        %v359 = vmul.f32 %v249, %v348
        %v360 = vmul.f32 %v250, %v352
        %v361 = vmul.f32 %v251, %v340
        %v362 = vmul.f32 %v252, %v344
        %v363 = vmul.f32 %v253, %v348
        %v364 = vmul.f32 %v254, %v352
        %v365 = vadd.f32 %v328, %v357
        %v366 = vadd.f32 %v329, %v358
        %v367 = vadd.f32 %v330, %v359
        %v368 = vadd.f32 %v331, %v360
        %v369 = vadd.f32 %v332, %v361
        %v370 = vadd.f32 %v333, %v362
        %v371 = vadd.f32 %v334, %v363
        %v372 = vadd.f32 %v335, %v364
        %v374 = vlaneseq
        %v375 = vshrl.u32 %v374, 7
        %v376 = vsub.s32 0, %v375
        %v377 = vrot.slane %v239, %v376
        %v378 = vlaneseq
        %v379 = vshrl.u32 %v378, 7
        %v380 = vsub.s32 1, %v379
        %v381 = vrot.slane %v239, %v380
        %v382 = vlaneseq
        %v383 = vshrl.u32 %v382, 7
        %v384 = vsub.s32 2, %v383
        %v385 = vrot.slane %v239, %v384
        %v386 = vlaneseq
        %v387 = vshrl.u32 %v386, 7
        %v388 = vsub.s32 3, %v387
        %v389 = vrot.slane %v239, %v388
        %v394 = vmul.f32 %v303, %v377
        %v395 = vmul.f32 %v301, %v381
        %v396 = vmul.f32 %v299, %v385
        %v397 = vmul.f32 %v305, %v389
        %v398 = vmul.f32 %v304, %v377
        %v399 = vmul.f32 %v302, %v381
        %v400 = vmul.f32 %v300, %v385
        %v401 = vmul.f32 %v306, %v389
        %v402 = vadd.f32 %v365, %v394
        %v403 = vadd.f32 %v366, %v395
        %v404 = vadd.f32 %v367, %v396
        %v405 = vadd.f32 %v368, %v397
        %v406 = vadd.f32 %v369, %v398
        %v407 = vadd.f32 %v370, %v399
        %v408 = vadd.f32 %v371, %v400
        %v409 = vadd.f32 %v372, %v401
        %v411 = vlaneseq
        %v412 = vshrl.u32 %v411, 7
        %v413 = vsub.s32 0, %v412
        %v414 = vrot.slane %v240, %v413
        %v415 = vlaneseq
        %v416 = vshrl.u32 %v415, 7
        %v417 = vsub.s32 1, %v416
        %v418 = vrot.slane %v240, %v417
        %v419 = vlaneseq
        %v420 = vshrl.u32 %v419, 7
        %v421 = vsub.s32 2, %v420
        %v422 = vrot.slane %v240, %v421
        %v423 = vlaneseq
        %v424 = vshrl.u32 %v423, 7
        %v425 = vsub.s32 3, %v424
        %v426 = vrot.slane %v240, %v425
        %v431 = vmul.f32 %v280, %v414
        %v432 = vmul.f32 %v278, %v418
        %v433 = vmul.f32 %v276, %v422
        %v434 = vmul.f32 %v274, %v426
        %v435 = vmul.f32 %v281, %v414
        %v436 = vmul.f32 %v279, %v418
        %v437 = vmul.f32 %v277, %v422
        %v438 = vmul.f32 %v275, %v426
        %v440 = vlaneseq
        %v441 = vshrl.u32 %v440, 7
        %v442 = vsub.s32 0, %v441
        %v443 = vrot.slane %v241, %v442
        %v444 = vlaneseq
        %v445 = vshrl.u32 %v444, 7
        %v446 = vsub.s32 1, %v445
        %v447 = vrot.slane %v241, %v446
        %v448 = vlaneseq
        %v449 = vshrl.u32 %v448, 7
        %v450 = vsub.s32 2, %v449
        %v451 = vrot.slane %v241, %v450
        %v452 = vlaneseq
        %v453 = vshrl.u32 %v452, 7
        %v454 = vsub.s32 3, %v453
        %v455 = vrot.slane %v241, %v454
        %v460 = vmul.f32 %v247, %v443
        %v461 = vmul.f32 %v248, %v447
        %v462 = vmul.f32 %v249, %v451
        %v463 = vmul.f32 %v250, %v455
        %v464 = vmul.f32 %v251, %v443
        %v465 = vmul.f32 %v252, %v447
        %v466 = vmul.f32 %v253, %v451
        %v467 = vmul.f32 %v254, %v455
        %v468 = vadd.f32 %v431, %v460
        %v469 = vadd.f32 %v432, %v461
        %v470 = vadd.f32 %v433, %v462
        %v471 = vadd.f32 %v434, %v463
        %v472 = vadd.f32 %v435, %v464
        %v473 = vadd.f32 %v436, %v465
        %v474 = vadd.f32 %v437, %v466
        %v475 = vadd.f32 %v438, %v467
        %v477 = vlaneseq
        %v478 = vshrl.u32 %v477, 7
        %v479 = vsub.s32 0, %v478
        %v480 = vrot.slane %v242, %v479
        %v481 = vlaneseq
        %v482 = vshrl.u32 %v481, 7
        %v483 = vsub.s32 1, %v482
        %v484 = vrot.slane %v242, %v483
        %v485 = vlaneseq
        %v486 = vshrl.u32 %v485, 7
        %v487 = vsub.s32 2, %v486
        %v488 = vrot.slane %v242, %v487
        %v489 = vlaneseq
        %v490 = vshrl.u32 %v489, 7
        %v491 = vsub.s32 3, %v490
        %v492 = vrot.slane %v242, %v491
        %v497 = vmul.f32 %v303, %v480
        %v498 = vmul.f32 %v301, %v484
        %v499 = vmul.f32 %v299, %v488
        %v500 = vmul.f32 %v305, %v492
        %v501 = vmul.f32 %v304, %v480
        %v502 = vmul.f32 %v302, %v484
        %v503 = vmul.f32 %v300, %v488
        %v504 = vmul.f32 %v306, %v492
        %v505 = vadd.f32 %v468, %v497
        %v506 = vadd.f32 %v469, %v498
        %v507 = vadd.f32 %v470, %v499
        %v508 = vadd.f32 %v471, %v500
        %v509 = vadd.f32 %v472, %v501
        %v510 = vadd.f32 %v473, %v502
        %v511 = vadd.f32 %v474, %v503
        %v512 = vadd.f32 %v475, %v504
        %v514 = vlaneseq
        %v515 = vshrl.u32 %v514, 7
        %v516 = vsub.s32 0, %v515
        %v517 = vrot.slane %v243, %v516
        %v518 = vlaneseq
        %v519 = vshrl.u32 %v518, 7
        %v520 = vsub.s32 1, %v519
        %v521 = vrot.slane %v243, %v520
        %v522 = vlaneseq
        %v523 = vshrl.u32 %v522, 7
        %v524 = vsub.s32 2, %v523
        %v525 = vrot.slane %v243, %v524
        %v526 = vlaneseq
        %v527 = vshrl.u32 %v526, 7
        %v528 = vsub.s32 3, %v527
        %v529 = vrot.slane %v243, %v528
        %v534 = vmul.f32 %v280, %v517
        %v535 = vmul.f32 %v278, %v521
        %v536 = vmul.f32 %v276, %v525
        %v537 = vmul.f32 %v274, %v529
        %v538 = vmul.f32 %v281, %v517
        %v539 = vmul.f32 %v279, %v521
        %v540 = vmul.f32 %v277, %v525
        %v541 = vmul.f32 %v275, %v529
        %v543 = vlaneseq
        %v544 = vshrl.u32 %v543, 7
        %v545 = vsub.s32 0, %v544
        %v546 = vrot.slane %v244, %v545
        %v547 = vlaneseq
        %v548 = vshrl.u32 %v547, 7
        %v549 = vsub.s32 1, %v548
        %v550 = vrot.slane %v244, %v549
        %v551 = vlaneseq
        %v552 = vshrl.u32 %v551, 7
        %v553 = vsub.s32 2, %v552
        %v554 = vrot.slane %v244, %v553
        %v555 = vlaneseq
        %v556 = vshrl.u32 %v555, 7
        %v557 = vsub.s32 3, %v556
        %v558 = vrot.slane %v244, %v557
        %v563 = vmul.f32 %v247, %v546
        %v564 = vmul.f32 %v248, %v550
        %v565 = vmul.f32 %v249, %v554
        %v566 = vmul.f32 %v250, %v558
        %v567 = vmul.f32 %v251, %v546
        %v568 = vmul.f32 %v252, %v550
        %v569 = vmul.f32 %v253, %v554
        %v570 = vmul.f32 %v254, %v558
        %v571 = vadd.f32 %v534, %v563
        %v572 = vadd.f32 %v535, %v564
        %v573 = vadd.f32 %v536, %v565
        %v574 = vadd.f32 %v537, %v566
        %v575 = vadd.f32 %v538, %v567
        %v576 = vadd.f32 %v539, %v568
        %v577 = vadd.f32 %v540, %v569
        %v578 = vadd.f32 %v541, %v570
        %v580 = vlaneseq
        %v581 = vshrl.u32 %v580, 7
        %v582 = vsub.s32 0, %v581
        %v583 = vrot.slane %v245, %v582
        %v584 = vlaneseq
        %v585 = vshrl.u32 %v584, 7
        %v586 = vsub.s32 1, %v585
        %v587 = vrot.slane %v245, %v586
        %v588 = vlaneseq
        %v589 = vshrl.u32 %v588, 7
        %v590 = vsub.s32 2, %v589
        %v591 = vrot.slane %v245, %v590
        %v592 = vlaneseq
        %v593 = vshrl.u32 %v592, 7
        %v594 = vsub.s32 3, %v593
        %v595 = vrot.slane %v245, %v594
        %v600 = vmul.f32 %v303, %v583
        %v601 = vmul.f32 %v301, %v587
        %v602 = vmul.f32 %v299, %v591
        %v603 = vmul.f32 %v305, %v595
        %v604 = vmul.f32 %v304, %v583
        %v605 = vmul.f32 %v302, %v587
        %v606 = vmul.f32 %v300, %v591
        %v607 = vmul.f32 %v306, %v595
        %v608 = vadd.f32 %v571, %v600
        %v609 = vadd.f32 %v572, %v601
        %v610 = vadd.f32 %v573, %v602
        %v611 = vadd.f32 %v574, %v603
        %v612 = vadd.f32 %v575, %v604
        %v613 = vadd.f32 %v576, %v605
        %v614 = vadd.f32 %v577, %v606
        %v615 = vadd.f32 %v578, %v607
        %v617 = vlaneseq
        %v618 = vshrl.u32 %v617, 7
        %v619 = vsub.s32 0, %v618
        %v620 = vrot.slane %v246, %v619
        %v621 = vlaneseq
        %v622 = vshrl.u32 %v621, 7
        %v623 = vsub.s32 1, %v622
        %v624 = vrot.slane %v246, %v623
        %v625 = vlaneseq
        %v626 = vshrl.u32 %v625, 7
        %v627 = vsub.s32 2, %v626
        %v628 = vrot.slane %v246, %v627
        %v629 = vlaneseq
        %v630 = vshrl.u32 %v629, 7
        %v631 = vsub.s32 3, %v630
        %v632 = vrot.slane %v246, %v631
        %v637 = vadd.f32 %v505, %v620
        %v638 = vadd.f32 %v506, %v624
        %v639 = vadd.f32 %v507, %v628
        %v640 = vadd.f32 %v508, %v632
        %v641 = vadd.f32 %v509, %v620
        %v642 = vadd.f32 %v510, %v624
        %v643 = vadd.f32 %v511, %v628
        %v644 = vadd.f32 %v512, %v632
        %v645 = vrot.slane %v402, 7
        %v646 = vrot.slane %v403, 7
        %v647 = vrot.slane %v404, 7
        %v648 = vrot.slane %v405, 7
        %v649 = vrot.slane %v406, 7
        %v650 = vrot.slane %v407, 7
        %v651 = vrot.slane %v408, 7
        %v652 = vrot.slane %v409, 7
        %v653 = vlaneseq
        %v654 = vshrl.u32 %v653, 7
        %vm655 = vcmp.lt.s32.totalorder %v654, 1
        %v656 = vsel %vm655, %v645, %v649
        %v657 = vsel %vm655, %v646, %v650
        %v658 = vsel %vm655, %v647, %v651
        %v659 = vsel %vm655, %v648, %v652
        %v660 = vsel %vm655, %v649, %v645
        %v661 = vsel %vm655, %v650, %v646
        %v662 = vsel %vm655, %v651, %v647
        %v663 = vsel %vm655, %v652, %v648
        %v664 = vadd.f32 %v637, %v660
        %v665 = vadd.f32 %v638, %v661
        %v666 = vadd.f32 %v639, %v662
        %v667 = vadd.f32 %v640, %v663
        %v668 = vadd.f32 %v641, %v656
        %v669 = vadd.f32 %v642, %v657
        %v670 = vadd.f32 %v643, %v658
        %v671 = vadd.f32 %v644, %v659
        %v672 = vrot.slane %v608, 1
        %v673 = vrot.slane %v609, 1
        %v674 = vrot.slane %v610, 1
        %v675 = vrot.slane %v611, 1
        %v676 = vrot.slane %v612, 1
        %v677 = vrot.slane %v613, 1
        %v678 = vrot.slane %v614, 1
        %v679 = vrot.slane %v615, 1
        %vm680 = vcmp.lt.s32.totalorder %v654, 7
        %v681 = vsel %vm680, %v672, %v676
        %v682 = vsel %vm680, %v673, %v677
        %v683 = vsel %vm680, %v674, %v678
        %v684 = vsel %vm680, %v675, %v679
        %v685 = vsel %vm680, %v676, %v672
        %v686 = vsel %vm680, %v677, %v673
        %v687 = vsel %vm680, %v678, %v674
        %v688 = vsel %vm680, %v679, %v675
        %v689 = vadd.f32 %v664, %v681
        %v690 = vadd.f32 %v665, %v682
        %v691 = vadd.f32 %v666, %v683
        %v692 = vadd.f32 %v667, %v684
        %v693 = vadd.f32 %v668, %v685
        %v694 = vadd.f32 %v669, %v686
        %v695 = vadd.f32 %v670, %v687
        %v696 = vadd.f32 %v671, %v688
        %v701 = vrot.slane %v608, 1
        %v702 = vrot.slane %v609, 1
        %v703 = vrot.slane %v610, 1
        %v704 = vrot.slane %v611, 1
        %v709 = vadd.f32 %v637, %v701
        %v710 = vadd.f32 %v638, %v702
        %v711 = vadd.f32 %v639, %v703
        %v712 = vadd.f32 %v640, %v704
        %v717 = vrot.slane %v406, 7
        %v718 = vrot.slane %v407, 7
        %v719 = vrot.slane %v408, 7
        %v720 = vrot.slane %v409, 7
        %v725 = vadd.f32 %v641, %v717
        %v726 = vadd.f32 %v642, %v718
        %v727 = vadd.f32 %v643, %v719
        %v728 = vadd.f32 %v644, %v720
        %729 = vst [vmem:[%s234] sm:$0xff] %v689
        %730 = vst [vmem:[%s234 + $0x8] sm:$0xff] %v690
        %731 = vst [vmem:[%s234 + $0x10] sm:$0xff] %v691
        %732 = vst [vmem:[%s234 + $0x18] sm:$0xff] %v692
        %733 = vst [vmem:[%s234 + $0x20] sm:$0xff] %v693
        %734 = vst [vmem:[%s234 + $0x28] sm:$0xff] %v694
        %735 = vst [vmem:[%s234 + $0x30] sm:$0xff] %v695
        %736 = vst [vmem:[%s234 + $0x38] sm:$0xff] %v696
        %v741 = vcombine.low %v709, %v710
        %v742 = vcombine.low %v711, %v712
        %v744 = vunpack.c.l.s4 1966171168
        %v745 = vunpack.c.0.s8 %v744
        %v746 = vlaneseq
        %v747 = vshrl.u32 %v746, 7
        %v748 = vsub.s32 %v745, %v747
        %v749 = vrot.slane %v741, %v748
        %v751 = vunpack.c.l.s4 1966171168
        %v752 = vunpack.c.0.s8 %v751
        %v753 = vlaneseq
        %v754 = vshrl.u32 %v753, 7
        %v755 = vsub.s32 %v752, %v754
        %v756 = vrot.slane %v742, %v755
        %v757 = vcombine.low %v749, %v756
        %v759 = vunpack.c.l.s4 1966171168
        %v760 = vunpack.c.0.s8 %v759
        %v761 = vlaneseq
        %v762 = vshrl.u32 %v761, 7
        %v763 = vsub.s32 %v760, %v762
        %v764 = vrot.slane %v757, %v763
        %v766 = vlaneseq
        %vm767 = vcmp.ge.s32.totalorder %v766, 0
        %vm768 = vcmp.lt.s32.totalorder %v766, 512
        %vm769 = vmand %vm767, %vm768
        %770 = vst.msk [vmem:[%s234] ss:$8 sm:$0xf] %vm769, %v764
        %771 = vst.msk [vmem:[%s234] ss:$8 sm:$0x0] %vm769, %v764
        %v776 = vcombine.high %v725, %v726
        %v777 = vcombine.high %v727, %v728
        %v779 = vunpack.c.l.s4 1966171168
        %v780 = vunpack.c.0.s8 %v779
        %v781 = vlaneseq
        %v782 = vshrl.u32 %v781, 7
        %v783 = vsub.s32 %v780, %v782
        %v784 = vrot.slane %v776, %v783
        %v786 = vunpack.c.l.s4 1966171168
        %v787 = vunpack.c.0.s8 %v786
        %v788 = vlaneseq
        %v789 = vshrl.u32 %v788, 7
        %v790 = vsub.s32 %v787, %v789
        %v791 = vrot.slane %v777, %v790
        %v792 = vcombine.high %v784, %v791
        %v794 = vunpack.c.l.s4 1966171168
        %v795 = vunpack.c.0.s8 %v794
        %v796 = vlaneseq
        %v797 = vshrl.u32 %v796, 7
        %v798 = vsub.s32 %v795, %v797
        %v799 = vrot.slane %v792, %v798
        %v800 = vcombine.high %v799, %v799
        %s802 = scalar_lea.vmem %s234, 39 [#allocation8]
        %803 = vst.msk [vmem:[%s802] ss:$8 sm:$0xf] %vm769, %v800
        %804 = vst.msk [vmem:[%s802] ss:$8 sm:$0x0] %vm769, %v800
        %s805 = sand.u32 %s113, 1
        %s806 = scalar_lea.sflag [#allocation4], %s805
        %s807 = sand.u32 %s113, 1
        %s808 = smul.addr %s807, 64
        %s809 = scalar_lea.vmem [#allocation8], %s808
        // Predicated region
        $region45: #{tpu_custom_call.1} parent=31 // pred_check
          %p810 = pneg %p123
        $region46: #{tpu_custom_call.1} parent=31 // pred_check_branch
          %812 = sbr.rel (%p810) target = $region48
        $region47: #{tpu_custom_call.1} parent=31 // pred_region
          %s813 = smul.u32 2, %s26
          %s815 = ssub.s32 1024, 1024
          %816 = vsyncadd %s806, %s815
          %s817 = smul.addr %s813, 4
          %s818 = smul.addr %s25, 8
          %s819 = sadd.s32 %s817, %s818
          %s820 = smul.addr %s819, 128
          %s821 = scalar_lea.hbm %s3, %s820
          %s822 = sshll.u32 %s809, 4
          %s823 = int_to_ptr.vmem [resolvable:$true] %s822
          %828 = dma.vmem_to_hbm [thread:$0]  %s823, 1024, %s821, %s806, 512, 512, 32
        $region48: #{tpu_custom_call.1} parent=31 // pred_fallthru
          _
      $region32: #{tpu_custom_call.1} parent=5 // pred_fallthru
        _
      %p829 = scmp.le.s32.totalorder 2, %s16
      // Predicated region
      $region49: #{tpu_custom_call.1} parent=5 // pred_check
        %p830 = pneg %p829
      $region50: #{tpu_custom_call.1} parent=5 // pred_check_branch
        %832 = sbr.rel (%p830) target = $region52
      $region51: #{tpu_custom_call.1} parent=5 // pred_region
        %s833 = ssub.s32 %s16, 2
        // Predicated region
        $region53: #{tpu_custom_call.1} parent=51 // pred_check
          %p834 = pneg %p129
        $region54: #{tpu_custom_call.1} parent=51 // pred_check_branch
          %836 = sbr.rel (%p834) target = $region56
        $region55: #{tpu_custom_call.1} parent=51 // pred_region
          %s837 = sand.u32 %s114, 1
          %s838 = scalar_lea.sflag [#allocation4], %s837
          %s839 = sand.u32 %s114, 1
          %s840 = smul.addr %s839, 64
          %s841 = scalar_lea.vmem [#allocation8], %s840
          %842 = dma.done %s838, 1024
        $region56: #{tpu_custom_call.1} parent=51 // pred_fallthru
          _
      $region52: #{tpu_custom_call.1} parent=5 // pred_fallthru
        _
    $region6: #{tpu_custom_call.1} parent=1 // loop_footer
      %s20 = sadd.s32 1, %s16
    $region7: #{tpu_custom_call.1} parent=1 // loop_footer_branch
      %15 = sbr.rel target = $region3
    $region8: #{tpu_custom_call.1} parent=1 // loop_exit
      _
    %843 = vsyncpa [#allocation3], 1
    %s844 = scalar_lea.sflag [#allocation3], 1
    %845 = vsyncpa %s844, 1
    %846 = vsyncpa [#allocation6], 1
    %847 = vsyncpa [#allocation4], 1
    %s848 = scalar_lea.sflag [#allocation4], 1
    %849 = vsyncpa %s848, 1

</llo_original>
